<compile_context>
chip_gen: v5e
topology: v5e:2x2
jax: 0.10.0
libtpu: 0.0.40
codegen_flags: <defaults>
</compile_context>

<pallas_src>
import functools

import jax
import jax.numpy as jnp
from jax.experimental import pallas as pl
from jax.experimental.pallas import tpu as pltpu


def _round_up(x: int, m: int) -> int:
    return ((x + m - 1) // m) * m


def attention_kernel(enc_ref, dec_ref,
                     w_enc_ref, b_enc_ref,
                     w_dec_ref, b_dec_ref,
                     w_full_ref, b_full_ref,
                     awe_ref, alpha_ref,
                     *, p_valid: int, use_bf16: bool):
    BT, Pp, E = enc_ref.shape
    A = w_enc_ref.shape[1]

    enc = enc_ref[...]                                   # (BT, Pp, E) f32
    dec = dec_ref[...]                                   # (BT, D)     f32
    w_enc = w_enc_ref[...]                               # (E, A)
    w_dec = w_dec_ref[...]                               # (D, A)

    if use_bf16:
        # MXU operands in bf16, f32 accumulation; all VPU/softmax math stays f32
        # (v5e has no bf16 VPU/EUP).
        enc_mm, w_enc_mm = enc.astype(jnp.bfloat16), w_enc.astype(jnp.bfloat16)
        dec_mm, w_dec_mm = dec.astype(jnp.bfloat16), w_dec.astype(jnp.bfloat16)
    else:
        enc_mm, w_enc_mm, dec_mm, w_dec_mm = enc, w_enc, dec, w_dec

    # att1 = encoder_att(encoder_out): one MXU matmul with M = BT*Pp.
    # Pp is padded to a multiple of 8, so merging (BT, Pp) is a free relayout.
    att1 = jnp.dot(enc_mm.reshape(BT * Pp, E), w_enc_mm,
                   preferred_element_type=jnp.float32) + b_enc_ref[...]
    att1 = att1.reshape(BT, Pp, A)                       # (BT, Pp, A)

    # att2 = decoder_att(decoder_hidden): whole batch tile in one matmul.
    att2 = jnp.dot(dec_mm, w_dec_mm,
                   preferred_element_type=jnp.float32) + b_dec_ref[...]   # (BT, A)

    # relu(att1 + att2.unsqueeze(1))
    s = jnp.maximum(att1 + att2[:, None, :], 0.0)        # (BT, Pp, A)

    # full_att (A -> 1) as a VPU multiply + lane reduce; scores lane-dense (BT, Pp).
    e = jnp.sum(s * w_full_ref[...], axis=-1) + b_full_ref[0]             # (BT, Pp)

    # Mask padded pixels before the softmax so no probability mass leaks into them.
    if p_valid != Pp:
        pix = jax.lax.broadcasted_iota(jnp.int32, (BT, Pp), 1)
        e = jnp.where(pix < p_valid, e, jnp.float32(-1e30))

    # Softmax over pixels (last / lane axis). Exact divide: the approx-reciprocal
    # path caused the previous `awe` tolerance failure.
    m = jnp.max(e, axis=-1, keepdims=True)               # (BT, 1)
    p = jnp.exp(e - m)                                   # (BT, Pp)
    alpha = p / jnp.sum(p, axis=-1, keepdims=True)       # (BT, Pp)

    # attention_weighted_encoding: VPU multiply + sublane reduce over pixels
    # instead of an M=1 batched MXU matmul (zero weight reuse on the MXU).
    awe = jnp.sum(alpha[:, :, None] * enc, axis=1)       # (BT, E) f32

    awe_ref[...] = awe.astype(awe_ref.dtype)
    alpha_ref[...] = alpha.astype(alpha_ref.dtype)


def attention_forward(encoder_out, decoder_hidden, params, *,
                      bt=None, use_bf16_matmul=False):
    """encoder_out: (B, P, E) f32, decoder_hidden: (B, D) f32.

    params holds nn.Linear weights pre-transposed to (in_dim, out_dim):
      w_enc (E, A), b_enc (A,), w_dec (D, A), b_dec (A,), w_full (A, 1), b_full (1,)
    Returns (attention_weighted_encoding (B, E), alpha (B, P)).
    """
    B, P, E = encoder_out.shape
    D = decoder_hidden.shape[1]
    A = params["w_enc"].shape[1]

    # ---- pad num_pixels: multiple of 8 (sublane) so the (BT, Pp) merge is free and
    # alpha rows are dense; multiple of 128 (lane) once P is large. ----
    P_pad = _round_up(P, 128) if P >= 96 else _round_up(P, 8)
    if P_pad != P:
        encoder_out = jnp.pad(encoder_out, ((0, 0), (0, P_pad - P), (0, 0)))

    # ---- VMEM-aware batch tile (feedback: derive bt from chip VMEM capacity). ----
    try:
        vmem_cap = int(pltpu.get_tpu_info().vmem_capacity_bytes)
    except Exception:  # no TPU visible (e.g. interpret mode) -> conservative v7x value
        vmem_cap = 64 * 1024 * 1024

    def vmem_estimate(bt_):
        enc_blk = bt_ * P_pad * E * 4          # encoder block (f32 in HBM/VMEM)
        dec_blk = bt_ * D * 4
        weights = (E * A + D * A + 3 * A) * 4
        outs = (bt_ * E + bt_ * P_pad) * 4
        # compiler scratch: att1 + s slabs, scores/alpha, enc held live for the
        # weighted sum.
        interm = (2 * bt_ * P_pad * A + 4 * bt_ * P_pad + bt_ * P_pad * E) * 4
        # BlockSpec pipeline double-buffers inputs and outputs.
        return 2 * (enc_blk + dec_blk + weights + outs) + interm

    if bt is None:
        budget = vmem_cap // 2
        bt = 8
        for cand in (64, 32, 16, 8):
            if vmem_estimate(cand) <= budget:
                bt = cand
                break
        bt = min(bt, max(8, _round_up(B, 8)))   # never tile past the (padded) batch

    # ---- pad the batch up to a multiple of bt (feedback: never collapse the whole
    # batch into one grid step when B % bt != 0). ----
    B_pad = _round_up(B, bt)
    if B_pad != B:
        encoder_out = jnp.pad(encoder_out, ((0, B_pad - B), (0, 0), (0, 0)))
        decoder_hidden = jnp.pad(decoder_hidden, ((0, B_pad - B), (0, 0)))

    w_enc, b_enc = params["w_enc"], params["b_enc"].reshape(1, A)
    w_dec, b_dec = params["w_dec"], params["b_dec"].reshape(1, A)
    w_full_row = params["w_full"].reshape(1, A)     # (A, 1) -> row (1, A)
    b_full = params["b_full"].reshape(1)            # scalar, lives in SMEM

    # Explicit scoped-VMEM budget (feedback: default 16/32 MiB limits would cripple
    # realistic shapes); clamped to the physical capacity.
    vmem_limit = int(min(vmem_cap, max(32 << 20, vmem_estimate(bt) + (8 << 20))))

    cost = pl.CostEstimate(
        flops=int(2 * B_pad * P_pad * E * A        # encoder projection (dominant)
                  + 2 * B_pad * D * A              # decoder projection
                  + 2 * B_pad * P_pad * A          # full_att reduce
                  + 2 * B_pad * P_pad * E),        # weighted sum
        transcendentals=int(B_pad * P_pad),        # softmax exp
        bytes_accessed=int(4 * (B_pad * P_pad * E + B_pad * D
                                + E * A + D * A + 3 * A
                                + B_pad * E + B_pad * P_pad)),
    )

    kernel = functools.partial(attention_kernel, p_valid=P, use_bf16=use_bf16_matmul)

    awe, alpha = pl.pallas_call(
        kernel,
        out_shape=(
            jax.ShapeDtypeStruct((B_pad, E), jnp.float32),
            jax.ShapeDtypeStruct((B_pad, P_pad), jnp.float32),
        ),
        grid_spec=pltpu.PrefetchScalarGridSpec(
            num_scalar_prefetch=0,
            grid=(B_pad // bt,),
            in_specs=[
                pl.BlockSpec((bt, P_pad, E), lambda b: (b, 0, 0)),  # encoder_out
                pl.BlockSpec((bt, D), lambda b: (b, 0)),            # decoder_hidden
                # Grid-constant weights/biases (block index never changes).
                # NOTE: on v7x, pipeline_mode=pl.Buffered(1) here would drop the
                # redundant second buffer; left out to stay robust across jax versions.
                pl.BlockSpec((E, A), lambda b: (0, 0)),             # W_enc (in, out)
                pl.BlockSpec((1, A), lambda b: (0, 0)),             # b_enc
                pl.BlockSpec((D, A), lambda b: (0, 0)),             # W_dec (in, out)
                pl.BlockSpec((1, A), lambda b: (0, 0)),             # b_dec
                pl.BlockSpec((1, A), lambda b: (0, 0)),             # W_full as a row
                pl.BlockSpec(memory_space=pltpu.MemorySpace.SMEM),  # b_full scalar
            ],
            out_specs=[
                pl.BlockSpec((bt, E), lambda b: (b, 0)),            # awe
                pl.BlockSpec((bt, P_pad), lambda b: (b, 0)),        # alpha (lane-dense)
            ],
        ),
        compiler_params=pltpu.CompilerParams(
            dimension_semantics=("parallel",),   # independent batch tiles
            vmem_limit_bytes=vmem_limit,
        ),
        cost_estimate=cost,
    )(encoder_out, decoder_hidden, w_enc, b_enc, w_dec, b_dec, w_full_row, b_full)

    # Strip batch / pixel padding.
    return awe[:B], alpha[:B, :P]


def attention_ref(encoder_out, decoder_hidden, params):
    """Pure-JAX reference mirroring the PyTorch forward (full f32 precision)."""
    hi = jax.lax.Precision.HIGHEST   # avoid XLA's default bf16 input truncation on TPU
    att1 = jnp.matmul(encoder_out, params["w_enc"], precision=hi) + params["b_enc"]
    att2 = jnp.matmul(decoder_hidden, params["w_dec"], precision=hi) + params["b_dec"]
    s = jnp.maximum(att1 + att2[:, None, :], 0.0)
    att = jnp.matmul(s, params["w_full"], precision=hi)[..., 0] + params["b_full"]
    alpha = jax.nn.softmax(att, axis=1)
    awe = jnp.sum(encoder_out * alpha[..., None], axis=1)
    return awe, alpha


if __name__ == "__main__":
    # Small, deterministic example shapes. B and P are deliberately NOT multiples
    # of 8 so the batch/pixel padding + softmax-masking paths are exercised.
    B, P = 12, 14          # batch, num_pixels
    E, D, A = 32, 48, 24   # encoder_dim, decoder_dim, attention_dim

    key = jax.random.PRNGKey(0)
    k = jax.random.split(key, 8)
    encoder_out = jax.random.normal(k[0], (B, P, E), dtype=jnp.float32)
    decoder_hidden = jax.random.normal(k[1], (B, D), dtype=jnp.float32)

    # nn.Linear parameters, stored pre-transposed as (in_dim, out_dim).
    params = {
        "w_enc": 0.1 * jax.random.normal(k[2], (E, A), dtype=jnp.float32),
        "b_enc": 0.1 * jax.random.normal(k[3], (A,), dtype=jnp.float32),
        "w_dec": 0.1 * jax.random.normal(k[4], (D, A), dtype=jnp.float32),
        "b_dec": 0.1 * jax.random.normal(k[5], (A,), dtype=jnp.float32),
        "w_full": 0.1 * jax.random.normal(k[6], (A, 1), dtype=jnp.float32),
        "b_full": 0.1 * jax.random.normal(k[7], (1,), dtype=jnp.float32),
    }

    awe, alpha = attention_forward(encoder_out, decoder_hidden, params)
    jax.block_until_ready((awe, alpha))

    awe_r, alpha_r = attention_ref(encoder_out, decoder_hidden, params)
    assert awe.shape == (B, E) and alpha.shape == (B, P)
    assert jnp.allclose(awe, awe_r, atol=2e-3, rtol=2e-3), "awe mismatch"
    assert jnp.allclose(alpha, alpha_r, atol=2e-3, rtol=2e-3), "alpha mismatch"
    assert jnp.allclose(jnp.sum(alpha, axis=1), 1.0, atol=1e-3), "softmax not normalized"

    print("KERNEL_OK")
</pallas_src>

<mosaic_0001>
module attributes {stable_mosaic.version = 11 : i64} {
  func.func @attention_kernel(%arg0: i32, %arg1: memref<16x16x32xf32, #tpu.memory_space<vmem>>, %arg2: memref<16x48xf32, #tpu.memory_space<vmem>>, %arg3: memref<32x24xf32, #tpu.memory_space<vmem>>, %arg4: memref<1x24xf32, #tpu.memory_space<vmem>>, %arg5: memref<48x24xf32, #tpu.memory_space<vmem>>, %arg6: memref<1x24xf32, #tpu.memory_space<vmem>>, %arg7: memref<1x24xf32, #tpu.memory_space<vmem>>, %arg8: memref<1xf32, #tpu.memory_space<smem>>, %arg9: memref<16x32xf32, #tpu.memory_space<vmem>>, %arg10: memref<16x16xf32, #tpu.memory_space<vmem>>) attributes {dimension_semantics = [#tpu.dimension_semantics<parallel>], iteration_bounds = array<i64: 1>, scalar_prefetch = 0 : i64, scratch_operands = 0 : i64, tpu.core_type = #tpu.core_type<tc>, window_params = [{transform_indices = @transform_0, window_bounds = array<i64: 16, 16, 32>}, {transform_indices = @transform_1, window_bounds = array<i64: 16, 48>}, {pipeline_mode = #tpu.pipeline_mode<synchronous>, transform_indices = @transform_2, window_bounds = array<i64: 32, 24>}, {pipeline_mode = #tpu.pipeline_mode<synchronous>, transform_indices = @transform_3, window_bounds = array<i64: 1, 24>}, {pipeline_mode = #tpu.pipeline_mode<synchronous>, transform_indices = @transform_4, window_bounds = array<i64: 48, 24>}, {pipeline_mode = #tpu.pipeline_mode<synchronous>, transform_indices = @transform_5, window_bounds = array<i64: 1, 24>}, {pipeline_mode = #tpu.pipeline_mode<synchronous>, transform_indices = @transform_6, window_bounds = array<i64: 1, 24>}, {transform_indices = @transform_7, window_bounds = array<i64: 1>}, {transform_indices = @transform_8, window_bounds = array<i64: 16, 32>}, {transform_indices = @transform_9, window_bounds = array<i64: 16, 16>}]} {
    %c0 = arith.constant 0 : index
    %c0_0 = arith.constant 0 : index
    %c0_1 = arith.constant 0 : index
    %0 = vector.load %arg1[%c0, %c0_0, %c0_1] : memref<16x16x32xf32, #tpu.memory_space<vmem>>, vector<16x16x32xf32>
    %c0_2 = arith.constant 0 : index
    %c0_3 = arith.constant 0 : index
    %1 = vector.load %arg2[%c0_2, %c0_3] : memref<16x48xf32, #tpu.memory_space<vmem>>, vector<16x48xf32>
    %c0_4 = arith.constant 0 : index
    %c0_5 = arith.constant 0 : index
    %2 = vector.load %arg3[%c0_4, %c0_5] : memref<32x24xf32, #tpu.memory_space<vmem>>, vector<32x24xf32>
    %c0_6 = arith.constant 0 : index
    %c0_7 = arith.constant 0 : index
    %3 = vector.load %arg5[%c0_6, %c0_7] : memref<48x24xf32, #tpu.memory_space<vmem>>, vector<48x24xf32>
    %4 = vector.shape_cast %0 : vector<16x16x32xf32> to vector<256x32xf32>
    %cst = arith.constant dense<0.000000e+00> : vector<256x24xf32>
    %5 = tpu.matmul %4, %2, %cst {dimension_numbers = #tpu.dot_dimension_numbers<[1], [0], [0], [1], [0, 0, 1, 1], [], []>} : vector<256x32xf32>, vector<32x24xf32>, vector<256x24xf32> -> vector<256x24xf32>
    %c0_8 = arith.constant 0 : index
    %c0_9 = arith.constant 0 : index
    %6 = vector.load %arg4[%c0_8, %c0_9] : memref<1x24xf32, #tpu.memory_space<vmem>>, vector<1x24xf32>
    %7 = vector.broadcast %6 : vector<1x24xf32> to vector<256x24xf32>
    %8 = arith.addf %5, %7 : vector<256x24xf32>
    %9 = vector.shape_cast %8 : vector<256x24xf32> to vector<16x16x24xf32>
    %cst_10 = arith.constant dense<0.000000e+00> : vector<16x24xf32>
    %10 = tpu.matmul %1, %3, %cst_10 {dimension_numbers = #tpu.dot_dimension_numbers<[1], [0], [0], [1], [0, 0, 1, 1], [], []>} : vector<16x48xf32>, vector<48x24xf32>, vector<16x24xf32> -> vector<16x24xf32>
    %c0_11 = arith.constant 0 : index
    %c0_12 = arith.constant 0 : index
    %11 = vector.load %arg6[%c0_11, %c0_12] : memref<1x24xf32, #tpu.memory_space<vmem>>, vector<1x24xf32>
    %12 = vector.broadcast %11 : vector<1x24xf32> to vector<16x24xf32>
    %13 = arith.addf %10, %12 : vector<16x24xf32>
    %14 = vector.shape_cast %13 : vector<16x24xf32> to vector<16x1x24xf32>
    %15 = vector.broadcast %14 : vector<16x1x24xf32> to vector<16x16x24xf32>
    %16 = arith.addf %9, %15 : vector<16x16x24xf32>
    %cst_13 = arith.constant 0.000000e+00 : f32
    %17 = vector.broadcast %cst_13 : f32 to vector<16x16x24xf32>
    %18 = arith.maximumf %16, %17 : vector<16x16x24xf32>
    %c0_14 = arith.constant 0 : index
    %c0_15 = arith.constant 0 : index
    %19 = vector.load %arg7[%c0_14, %c0_15] : memref<1x24xf32, #tpu.memory_space<vmem>>, vector<1x24xf32>
    %20 = vector.shape_cast %19 : vector<1x24xf32> to vector<1x1x24xf32>
    %21 = vector.broadcast %20 : vector<1x1x24xf32> to vector<16x16x24xf32>
    %22 = arith.mulf %18, %21 : vector<16x16x24xf32>
    %cst_16 = arith.constant dense<0.000000e+00> : vector<16x16xf32>
    %23 = vector.multi_reduction <add>, %22, %cst_16 [2] : vector<16x16x24xf32> to vector<16x16xf32>
    %c0_17 = arith.constant 0 : index
    %24 = memref.load %arg8[%c0_17] : memref<1xf32, #tpu.memory_space<smem>>
    %25 = vector.broadcast %24 : f32 to vector<16x16xf32>
    %26 = arith.addf %23, %25 : vector<16x16xf32>
    %27 = tpu.iota {dimensions = array<i32: 1>} : vector<16x16xi32>
    %c14_i32 = arith.constant 14 : i32
    %28 = vector.broadcast %c14_i32 : i32 to vector<16x16xi32>
    %29 = arith.cmpi slt, %27, %28 : vector<16x16xi32>
    %cst_18 = arith.constant -1.000000e+30 : f32
    %30 = vector.broadcast %cst_18 : f32 to vector<16x16xf32>
    %31 = arith.select %29, %26, %30 : vector<16x16xi1>, vector<16x16xf32>
    %cst_19 = arith.constant dense<0xFF800000> : vector<16xf32>
    %32 = vector.multi_reduction <maximumf>, %31, %cst_19 [1] : vector<16x16xf32> to vector<16xf32>
    %33 = vector.shape_cast %32 : vector<16xf32> to vector<16x1xf32>
    %34 = vector.broadcast %33 : vector<16x1xf32> to vector<16x16xf32>
    %35 = arith.subf %31, %34 : vector<16x16xf32>
    %36 = math.exp %35 : vector<16x16xf32>
    %cst_20 = arith.constant dense<0.000000e+00> : vector<16xf32>
    %37 = vector.multi_reduction <add>, %36, %cst_20 [1] : vector<16x16xf32> to vector<16xf32>
    %38 = vector.shape_cast %37 : vector<16xf32> to vector<16x1xf32>
    %39 = vector.broadcast %38 : vector<16x1xf32> to vector<16x16xf32>
    %40 = arith.divf %36, %39 : vector<16x16xf32>
    %41 = vector.shape_cast %40 : vector<16x16xf32> to vector<16x16x1xf32>
    %42 = vector.broadcast %41 : vector<16x16x1xf32> to vector<16x16x32xf32>
    %43 = arith.mulf %42, %0 : vector<16x16x32xf32>
    %cst_21 = arith.constant dense<0.000000e+00> : vector<16x32xf32>
    %44 = vector.multi_reduction <add>, %43, %cst_21 [1] : vector<16x16x32xf32> to vector<16x32xf32>
    %c0_22 = arith.constant 0 : index
    %c0_23 = arith.constant 0 : index
    %45 = vector.load %arg9[%c0_22, %c0_23] : memref<16x32xf32, #tpu.memory_space<vmem>>, vector<16x32xf32>
    tpu.vector_store %arg9[%c0_22, %c0_23], %44 {strides = array<i32>} : memref<16x32xf32, #tpu.memory_space<vmem>>, vector<16x32xf32>,
    %c0_24 = arith.constant 0 : index
    %c0_25 = arith.constant 0 : index
    %46 = vector.load %arg10[%c0_24, %c0_25] : memref<16x16xf32, #tpu.memory_space<vmem>>, vector<16x16xf32>
    tpu.vector_store %arg10[%c0_24, %c0_25], %40 {strides = array<i32>} : memref<16x16xf32, #tpu.memory_space<vmem>>, vector<16x16xf32>,
    return
  }
  func.func @transform_0(%arg0: i32) -> (i32, i32, i32) {
    %c0_i32 = arith.constant 0 : i32
    %c0_i32_0 = arith.constant 0 : i32
    %c0_i32_1 = arith.constant 0 : i32
    return %arg0, %c0_i32, %c0_i32_0 : i32, i32, i32
  }
  func.func @transform_1(%arg0: i32) -> (i32, i32) {
    %c0_i32 = arith.constant 0 : i32
    %c0_i32_0 = arith.constant 0 : i32
    return %arg0, %c0_i32 : i32, i32
  }
  func.func @transform_2(%arg0: i32) -> (i32, i32) {
    %c0_i32 = arith.constant 0 : i32
    %c0_i32_0 = arith.constant 0 : i32
    %c0_i32_1 = arith.constant 0 : i32
    return %c0_i32, %c0_i32_0 : i32, i32
  }
  func.func @transform_3(%arg0: i32) -> (i32, i32) {
    %c0_i32 = arith.constant 0 : i32
    %c0_i32_0 = arith.constant 0 : i32
    %c0_i32_1 = arith.constant 0 : i32
    return %c0_i32, %c0_i32_0 : i32, i32
  }
  func.func @transform_4(%arg0: i32) -> (i32, i32) {
    %c0_i32 = arith.constant 0 : i32
    %c0_i32_0 = arith.constant 0 : i32
    %c0_i32_1 = arith.constant 0 : i32
    return %c0_i32, %c0_i32_0 : i32, i32
  }
  func.func @transform_5(%arg0: i32) -> (i32, i32) {
    %c0_i32 = arith.constant 0 : i32
    %c0_i32_0 = arith.constant 0 : i32
    %c0_i32_1 = arith.constant 0 : i32
    return %c0_i32, %c0_i32_0 : i32, i32
  }
  func.func @transform_6(%arg0: i32) -> (i32, i32) {
    %c0_i32 = arith.constant 0 : i32
    %c0_i32_0 = arith.constant 0 : i32
    %c0_i32_1 = arith.constant 0 : i32
    return %c0_i32, %c0_i32_0 : i32, i32
  }
  func.func @transform_7(%arg0: i32) -> i32 {
    %c0_i32 = arith.constant 0 : i32
    %c0_i32_0 = arith.constant 0 : i32
    return %c0_i32 : i32
  }
  func.func @transform_8(%arg0: i32) -> (i32, i32) {
    %c0_i32 = arith.constant 0 : i32
    %c0_i32_0 = arith.constant 0 : i32
    return %arg0, %c0_i32 : i32, i32
  }
  func.func @transform_9(%arg0: i32) -> (i32, i32) {
    %c0_i32 = arith.constant 0 : i32
    %c0_i32_0 = arith.constant 0 : i32
    return %arg0, %c0_i32 : i32, i32
  }
}

</mosaic_0001>

<llo_original>
// kernel: tpu_custom_call.1
$region0: #{tpu_custom_call.1}
  #allocation0 [shape = 'u32[]', space=smem, size = 0x4, offset = 0x4, fixed_abs, tag = 'smem constant byte address 0x4 - core index']
  #allocation1 [shape = 'u32[72,128]{1,0:T(1,128)}', space=vmem, size = 0x9000, scoped, tag = 'internal scratch']
  #allocation2 [shape = 'f32[1]{0:T(128)S(6)}', space=smem, size = 0x200, scoped, tag = 'scoped memory for tpu_custom_call.1']
  %s0 = inlined_call_operand.hbm [shape: f32[16,16,32], index: 0, kind: input, shape index: {}]
  %s1 = inlined_call_operand.vmem [shape: f32[16,48], index: 1, kind: input, shape index: {}]
  %s2 = inlined_call_operand.vmem [shape: f32[32,24], index: 2, kind: input, shape index: {}]
  %s3 = inlined_call_operand.vmem [shape: f32[1,24], index: 3, kind: input, shape index: {}]
  %s4 = inlined_call_operand.vmem [shape: f32[48,24], index: 4, kind: input, shape index: {}]
  %s5 = inlined_call_operand.vmem [shape: f32[1,24], index: 5, kind: input, shape index: {}]
  %s6 = inlined_call_operand.vmem [shape: f32[1,24], index: 6, kind: input, shape index: {}]
  %s7 = inlined_call_operand.<no memory space> [shape: f32[1], index: 7, kind: input, shape index: {}]
  %s8 = inlined_call_operand.hbm [shape: f32[16,32], index: 8, kind: output, shape index: {0}]
  %s9 = inlined_call_operand.hbm [shape: f32[16,16], index: 9, kind: output, shape index: {1}]
  %10 = xla_tuple %s8, %s9
  %s11 = sld [smem:[#allocation0]]
  $region54: #{tpu_custom_call.1} parent=0
    _
  %s13 = ssub.s32 1, %s11
  %s14 = scalar_select 0, %s13, %s11
  %15 = sst [smem:[#allocation2]] %s7
  $region1: #{tpu_custom_call.1} parent=0
    #allocation3 [shape = 'u8[131072]{0}', space=vmem, size = 0x20000, scoped, tag = 'input window, operand 0, single buffered']
    #allocation4 [shape = 's32[1]{0}', space=sflag, size = 0x4, scoped, tag = 'scoped memory for tpu_custom_call.1']
    #allocation5 [shape = 's32[1]{0}', space=sflag, size = 0x4, scoped, tag = 'scoped memory for tpu_custom_call.1']
    #allocation6 [shape = 'u8[8192]{0}', space=vmem, size = 0x2000, scoped, tag = 'output window, operand 0, single buffered']
    #allocation7 [shape = 'u8[8192]{0}', space=vmem, size = 0x2000, scoped, tag = 'output window, operand 1, single buffered']
    #allocation8 [shape = 's32[1]{0}', space=sflag, size = 0x4, scoped, tag = 'scoped memory for tpu_custom_call.1']
    %16 = vsyncpa [#allocation4], 0
    %17 = vsyncpa [#allocation5], 0
    %18 = vsyncpa [#allocation8], 0
    // Predicated region
    $region2: #{tpu_custom_call.1} parent=1 // pred_check
      _
    $region3: #{tpu_custom_call.1} parent=1 // pred_check_branch
      %20 = sbr.rel (0) target = $region5
    $region4: #{tpu_custom_call.1} parent=1 // pred_region
      %22 = vsyncadd [#allocation4], 0
      %s23 = sshll.u32 %s0, 4
      %s24 = int_to_ptr.hbm [resolvable:$true] %s23
      %s25 = sshll.u32 [#allocation3], 4
      %s26 = int_to_ptr.vmem [resolvable:$true] %s25
      %31 = dma.hbm_to_vmem [thread:$0]  %s24, 4096, %s26, [#allocation4], 128, 128, 8
    $region5: #{tpu_custom_call.1} parent=1 // pred_fallthru
      _
    // Predicated region
    $region6: #{tpu_custom_call.1} parent=1 // pred_check
      _
    $region7: #{tpu_custom_call.1} parent=1 // pred_check_branch
      %33 = sbr.rel (0) target = $region9
    $region8: #{tpu_custom_call.1} parent=1 // pred_region
      _
    $region9: #{tpu_custom_call.1} parent=1 // pred_fallthru
      _
    // Predicated region
    $region10: #{tpu_custom_call.1} parent=1 // pred_check
      _
    $region11: #{tpu_custom_call.1} parent=1 // pred_check_branch
      %35 = sbr.rel (0) target = $region13
    $region12: #{tpu_custom_call.1} parent=1 // pred_region
      _
    $region13: #{tpu_custom_call.1} parent=1 // pred_fallthru
      _
    // Predicated region
    $region14: #{tpu_custom_call.1} parent=1 // pred_check
      _
    $region15: #{tpu_custom_call.1} parent=1 // pred_check_branch
      %37 = sbr.rel (0) target = $region17
    $region16: #{tpu_custom_call.1} parent=1 // pred_region
      _
    $region17: #{tpu_custom_call.1} parent=1 // pred_fallthru
      _
    // Predicated region
    $region18: #{tpu_custom_call.1} parent=1 // pred_check
      _
    $region19: #{tpu_custom_call.1} parent=1 // pred_check_branch
      %39 = sbr.rel (0) target = $region21
    $region20: #{tpu_custom_call.1} parent=1 // pred_region
      _
    $region21: #{tpu_custom_call.1} parent=1 // pred_fallthru
      _
    // Predicated region
    $region22: #{tpu_custom_call.1} parent=1 // pred_check
      _
    $region23: #{tpu_custom_call.1} parent=1 // pred_check_branch
      %41 = sbr.rel (0) target = $region25
    $region24: #{tpu_custom_call.1} parent=1 // pred_region
      _
    $region25: #{tpu_custom_call.1} parent=1 // pred_fallthru
      _
    // Predicated region
    $region26: #{tpu_custom_call.1} parent=1 // pred_check
      _
    $region27: #{tpu_custom_call.1} parent=1 // pred_check_branch
      %43 = sbr.rel (0) target = $region29
    $region28: #{tpu_custom_call.1} parent=1 // pred_region
      _
    $region29: #{tpu_custom_call.1} parent=1 // pred_fallthru
      _
    // Predicated region
    $region30: #{tpu_custom_call.1} parent=1 // pred_check
      _
    $region31: #{tpu_custom_call.1} parent=1 // pred_check_branch
      %45 = sbr.rel (0) target = $region33
    $region32: #{tpu_custom_call.1} parent=1 // pred_region
      _
    $region33: #{tpu_custom_call.1} parent=1 // pred_fallthru
      _
    // Predicated region
    $region34: #{tpu_custom_call.1} parent=1 // pred_check
      _
    $region35: #{tpu_custom_call.1} parent=1 // pred_check_branch
      %47 = sbr.rel (0) target = $region37
    $region36: #{tpu_custom_call.1} parent=1 // pred_region
      %49 = dma.done [#allocation4], 4096
    $region37: #{tpu_custom_call.1} parent=1 // pred_fallthru
      _
    %v50 = vld [vmem:[#allocation3] sm:$0xff]
    %v51 = vld [vmem:[#allocation3 + $0x8] sm:$0xff]
    %v52 = vld [vmem:[#allocation3 + $0x10] sm:$0xff]
    %v53 = vld [vmem:[#allocation3 + $0x18] sm:$0xff]
    %v54 = vld [vmem:[#allocation3 + $0x20] sm:$0xff]
    %v55 = vld [vmem:[#allocation3 + $0x28] sm:$0xff]
    %v56 = vld [vmem:[#allocation3 + $0x30] sm:$0xff]
    %v57 = vld [vmem:[#allocation3 + $0x38] sm:$0xff]
    %v58 = vld [vmem:[#allocation3 + $0x40] sm:$0xff]
    %v59 = vld [vmem:[#allocation3 + $0x48] sm:$0xff]
    %v60 = vld [vmem:[#allocation3 + $0x50] sm:$0xff]
    %v61 = vld [vmem:[#allocation3 + $0x58] sm:$0xff]
    %v62 = vld [vmem:[#allocation3 + $0x60] sm:$0xff]
    %v63 = vld [vmem:[#allocation3 + $0x68] sm:$0xff]
    %v64 = vld [vmem:[#allocation3 + $0x70] sm:$0xff]
    %v65 = vld [vmem:[#allocation3 + $0x78] sm:$0xff]
    %v66 = vld [vmem:[#allocation3 + $0x80] sm:$0xff]
    %v67 = vld [vmem:[#allocation3 + $0x88] sm:$0xff]
    %v68 = vld [vmem:[#allocation3 + $0x90] sm:$0xff]
    %v69 = vld [vmem:[#allocation3 + $0x98] sm:$0xff]
    %v70 = vld [vmem:[#allocation3 + $0xa0] sm:$0xff]
    %v71 = vld [vmem:[#allocation3 + $0xa8] sm:$0xff]
    %v72 = vld [vmem:[#allocation3 + $0xb0] sm:$0xff]
    %v73 = vld [vmem:[#allocation3 + $0xb8] sm:$0xff]
    %v74 = vld [vmem:[#allocation3 + $0xc0] sm:$0xff]
    %v75 = vld [vmem:[#allocation3 + $0xc8] sm:$0xff]
    %v76 = vld [vmem:[#allocation3 + $0xd0] sm:$0xff]
    %v77 = vld [vmem:[#allocation3 + $0xd8] sm:$0xff]
    %v78 = vld [vmem:[#allocation3 + $0xe0] sm:$0xff]
    %v79 = vld [vmem:[#allocation3 + $0xe8] sm:$0xff]
    %v80 = vld [vmem:[#allocation3 + $0xf0] sm:$0xff]
    %v81 = vld [vmem:[#allocation3 + $0xf8] sm:$0xff]
    %v82 = vld [vmem:[%s1] sm:$0xff]
    %v83 = vld [vmem:[%s1 + $0x8] sm:$0xff]
    %v84 = vld [vmem:[%s2] sm:$0xff]
    %v85 = vld [vmem:[%s2 + $0x8] sm:$0xff]
    %v86 = vld [vmem:[%s2 + $0x10] sm:$0xff]
    %v87 = vld [vmem:[%s2 + $0x18] sm:$0xff]
    %v88 = vld [vmem:[%s4] sm:$0xff]
    %v89 = vld [vmem:[%s4 + $0x8] sm:$0xff]
    %v90 = vld [vmem:[%s4 + $0x10] sm:$0xff]
    %v91 = vld [vmem:[%s4 + $0x18] sm:$0xff]
    %v92 = vld [vmem:[%s4 + $0x20] sm:$0xff]
    %v93 = vld [vmem:[%s4 + $0x28] sm:$0xff]
    %v94 = vld [vmem:[%s3] sm:$0x1]
    %v96 = vperm.slane %v94, 0
    %vm98 = vcmask 261120
    %v100 = vsel %vm98, %v50, 0
    %v103 = vsel %vm98, %v51, 0
    %v106 = vsel %vm98, %v52, 0
    %v109 = vsel %vm98, %v53, 0
    %v112 = vsel %vm98, %v54, 0
    %v115 = vsel %vm98, %v55, 0
    %v118 = vsel %vm98, %v56, 0
    %v121 = vsel %vm98, %v57, 0
    %v124 = vsel %vm98, %v58, 0
    %v127 = vsel %vm98, %v59, 0
    %v130 = vsel %vm98, %v60, 0
    %v133 = vsel %vm98, %v61, 0
    %v136 = vsel %vm98, %v62, 0
    %v139 = vsel %vm98, %v63, 0
    %v142 = vsel %vm98, %v64, 0
    %v145 = vsel %vm98, %v65, 0
    %v148 = vsel %vm98, %v66, 0
    %v151 = vsel %vm98, %v67, 0
    %v154 = vsel %vm98, %v68, 0
    %v157 = vsel %vm98, %v69, 0
    %v160 = vsel %vm98, %v70, 0
    %v163 = vsel %vm98, %v71, 0
    %v166 = vsel %vm98, %v72, 0
    %v169 = vsel %vm98, %v73, 0
    %v172 = vsel %vm98, %v74, 0
    %v175 = vsel %vm98, %v75, 0
    %v178 = vsel %vm98, %v76, 0
    %v181 = vsel %vm98, %v77, 0
    %v184 = vsel %vm98, %v78, 0
    %v187 = vsel %vm98, %v79, 0
    %v190 = vsel %vm98, %v80, 0
    %v193 = vsel %vm98, %v81, 0
    %195 = vmatpush.msra.mxu0 0.0
    %196 = vmatpush.msra.mxu0 0.0
    %197 = vmatpush.msra.mxu0 0.0
    %198 = vmatpush.msra.mxu0 0.0
    %199 = vmatpush.msra.mxu0 0.0
    %200 = vmatpush.msra.mxu0 0.0
    %201 = vmatpush.msra.mxu0 0.0
    %202 = vmatpush.msra.mxu0 0.0
    %203 = vmatpush.msra.mxu0 0.0
    %204 = vmatpush.msra.mxu0 0.0
    %205 = vmatpush.msra.mxu0 0.0
    %206 = vmatpush.msra.mxu0 0.0
    %207 = vmatpush.msra.mxu0 %v87
    %208 = vmatpush.msra.mxu0 %v86
    %209 = vmatpush.msra.mxu0 %v85
    %210 = vmatpush.msra.mxu0 %v84
    %211 = vmatmul.f32.gmra.mxu0 %v100
    %v212 = vpop.f32.mrf.mxu0
    %v213 = vadd.f32 %v96, %v212
    %214 = vmatmul.f32.gmra.mxu0 %v103
    %v215 = vpop.f32.mrf.mxu0
    %v216 = vadd.f32 %v96, %v215
    %217 = vmatmul.f32.gmra.mxu0 %v106
    %v218 = vpop.f32.mrf.mxu0
    %v219 = vadd.f32 %v96, %v218
    %220 = vmatmul.f32.gmra.mxu0 %v109
    %v221 = vpop.f32.mrf.mxu0
    %v222 = vadd.f32 %v96, %v221
    %223 = vmatmul.f32.gmra.mxu0 %v112
    %v224 = vpop.f32.mrf.mxu0
    %v225 = vadd.f32 %v96, %v224
    %226 = vmatmul.f32.gmra.mxu0 %v115
    %v227 = vpop.f32.mrf.mxu0
    %v228 = vadd.f32 %v96, %v227
    %229 = vmatmul.f32.gmra.mxu0 %v118
    %v230 = vpop.f32.mrf.mxu0
    %v231 = vadd.f32 %v96, %v230
    %232 = vmatmul.f32.gmra.mxu0 %v121
    %v233 = vpop.f32.mrf.mxu0
    %v234 = vadd.f32 %v96, %v233
    %235 = vmatmul.f32.gmra.mxu0 %v124
    %v236 = vpop.f32.mrf.mxu0
    %v237 = vadd.f32 %v96, %v236
    %238 = vmatmul.f32.gmra.mxu0 %v127
    %v239 = vpop.f32.mrf.mxu0
    %v240 = vadd.f32 %v96, %v239
    %241 = vmatmul.f32.gmra.mxu0 %v130
    %v242 = vpop.f32.mrf.mxu0
    %v243 = vadd.f32 %v96, %v242
    %244 = vmatmul.f32.gmra.mxu0 %v133
    %v245 = vpop.f32.mrf.mxu0
    %v246 = vadd.f32 %v96, %v245
    %247 = vmatmul.f32.gmra.mxu0 %v136
    %v248 = vpop.f32.mrf.mxu0
    %v249 = vadd.f32 %v96, %v248
    %250 = vmatmul.f32.gmra.mxu0 %v139
    %v251 = vpop.f32.mrf.mxu0
    %v252 = vadd.f32 %v96, %v251
    %253 = vmatmul.f32.gmra.mxu0 %v142
    %v254 = vpop.f32.mrf.mxu0
    %v255 = vadd.f32 %v96, %v254
    %256 = vmatmul.f32.gmra.mxu0 %v145
    %v257 = vpop.f32.mrf.mxu0
    %v258 = vadd.f32 %v96, %v257
    %259 = vmatmul.f32.gmra.mxu0 %v148
    %v260 = vpop.f32.mrf.mxu0
    %v261 = vadd.f32 %v96, %v260
    %262 = vmatmul.f32.gmra.mxu0 %v151
    %v263 = vpop.f32.mrf.mxu0
    %v264 = vadd.f32 %v96, %v263
    %265 = vmatmul.f32.gmra.mxu0 %v154
    %v266 = vpop.f32.mrf.mxu0
    %v267 = vadd.f32 %v96, %v266
    %268 = vmatmul.f32.gmra.mxu0 %v157
    %v269 = vpop.f32.mrf.mxu0
    %v270 = vadd.f32 %v96, %v269
    %271 = vmatmul.f32.gmra.mxu0 %v160
    %v272 = vpop.f32.mrf.mxu0
    %v273 = vadd.f32 %v96, %v272
    %274 = vmatmul.f32.gmra.mxu0 %v163
    %v275 = vpop.f32.mrf.mxu0
    %v276 = vadd.f32 %v96, %v275
    %277 = vmatmul.f32.gmra.mxu0 %v166
    %v278 = vpop.f32.mrf.mxu0
    %v279 = vadd.f32 %v96, %v278
    %280 = vmatmul.f32.gmra.mxu0 %v169
    %v281 = vpop.f32.mrf.mxu0
    %v282 = vadd.f32 %v96, %v281
    %283 = vmatmul.f32.gmra.mxu0 %v172
    %v284 = vpop.f32.mrf.mxu0
    %v285 = vadd.f32 %v96, %v284
    %286 = vmatmul.f32.gmra.mxu0 %v175
    %v287 = vpop.f32.mrf.mxu0
    %v288 = vadd.f32 %v96, %v287
    %289 = vmatmul.f32.gmra.mxu0 %v178
    %v290 = vpop.f32.mrf.mxu0
    %v291 = vadd.f32 %v96, %v290
    %292 = vmatmul.f32.gmra.mxu0 %v181
    %v293 = vpop.f32.mrf.mxu0
    %v294 = vadd.f32 %v96, %v293
    %295 = vmatmul.f32.gmra.mxu0 %v184
    %v296 = vpop.f32.mrf.mxu0
    %v297 = vadd.f32 %v96, %v296
    %298 = vmatmul.f32.gmra.mxu0 %v187
    %v299 = vpop.f32.mrf.mxu0
    %v300 = vadd.f32 %v96, %v299
    %301 = vmatmul.f32.gmra.mxu0 %v190
    %v302 = vpop.f32.mrf.mxu0
    %v303 = vadd.f32 %v96, %v302
    %304 = vmatmul.f32.gmra.mxu0 %v193
    %v305 = vpop.f32.mrf.mxu0
    %v306 = vadd.f32 %v96, %v305
    %307 = vdwg.mxu0
    %v308 = vld [vmem:[%s5] sm:$0x1]
    %v310 = vperm.slane %v308, 0
    %vm312 = vcmask 392192
    %v314 = vsel %vm312, %v82, 0
    %v317 = vsel %vm312, %v83, 0
    %319 = vmatpush.msra.mxu0 0.0
    %320 = vmatpush.msra.mxu0 0.0
    %321 = vmatpush.msra.mxu0 0.0
    %322 = vmatpush.msra.mxu0 0.0
    %323 = vmatpush.msra.mxu0 0.0
    %324 = vmatpush.msra.mxu0 0.0
    %325 = vmatpush.msra.mxu0 0.0
    %326 = vmatpush.msra.mxu0 0.0
    %327 = vmatpush.msra.mxu0 0.0
    %328 = vmatpush.msra.mxu0 0.0
    %329 = vmatpush.msra.mxu0 %v93
    %330 = vmatpush.msra.mxu0 %v92
    %331 = vmatpush.msra.mxu0 %v91
    %332 = vmatpush.msra.mxu0 %v90
    %333 = vmatpush.msra.mxu0 %v89
    %334 = vmatpush.msra.mxu0 %v88
    %335 = vmatmul.f32.gmra.mxu0 %v314
    %v336 = vpop.f32.mrf.mxu0
    %v337 = vadd.f32 %v310, %v336
    %338 = vmatmul.f32.gmra.mxu0 %v317
    %v339 = vpop.f32.mrf.mxu0
    %v340 = vadd.f32 %v310, %v339
    %341 = vdwg.mxu0
    %v344 = vrot.slane %v337, 1
    %v345 = vrot.slane %v337, 2
    %v346 = vrot.slane %v337, 3
    %v347 = vrot.slane %v337, 4
    %v348 = vrot.slane %v337, 5
    %v349 = vrot.slane %v337, 6
    %v350 = vrot.slane %v337, 7
    %v351 = vrot.slane %v340, 1
    %v352 = vrot.slane %v340, 2
    %v353 = vrot.slane %v340, 3
    %v354 = vrot.slane %v340, 4
    %v355 = vrot.slane %v340, 5
    %v356 = vrot.slane %v340, 6
    %v357 = vrot.slane %v340, 7
    %v358 = vperm.slane %v337, 0
    %v359 = vperm.slane %v344, 0
    %v360 = vperm.slane %v345, 0
    %v361 = vperm.slane %v346, 0
    %v362 = vperm.slane %v347, 0
    %v363 = vperm.slane %v348, 0
    %v364 = vperm.slane %v349, 0
    %v365 = vperm.slane %v350, 0
    %v366 = vperm.slane %v340, 0
    %v367 = vperm.slane %v351, 0
    %v368 = vperm.slane %v352, 0
    %v369 = vperm.slane %v353, 0
    %v370 = vperm.slane %v354, 0
    %v371 = vperm.slane %v355, 0
    %v372 = vperm.slane %v356, 0
    %v373 = vperm.slane %v357, 0
    %v390 = vadd.f32 %v213, %v358
    %v391 = vadd.f32 %v216, %v358
    %v392 = vadd.f32 %v219, %v359
    %v393 = vadd.f32 %v222, %v359
    %v394 = vadd.f32 %v225, %v360
    %v395 = vadd.f32 %v228, %v360
    %v396 = vadd.f32 %v231, %v361
    %v397 = vadd.f32 %v234, %v361
    %v398 = vadd.f32 %v237, %v362
    %v399 = vadd.f32 %v240, %v362
    %v400 = vadd.f32 %v243, %v363
    %v401 = vadd.f32 %v246, %v363
    %v402 = vadd.f32 %v249, %v364
    %v403 = vadd.f32 %v252, %v364
    %v404 = vadd.f32 %v255, %v365
    %v405 = vadd.f32 %v258, %v365
    %v406 = vadd.f32 %v261, %v366
    %v407 = vadd.f32 %v264, %v366
    %v408 = vadd.f32 %v267, %v367
    %v409 = vadd.f32 %v270, %v367
    %v410 = vadd.f32 %v273, %v368
    %v411 = vadd.f32 %v276, %v368
    %v412 = vadd.f32 %v279, %v369
    %v413 = vadd.f32 %v282, %v369
    %v414 = vadd.f32 %v285, %v370
    %v415 = vadd.f32 %v288, %v370
    %v416 = vadd.f32 %v291, %v371
    %v417 = vadd.f32 %v294, %v371
    %v418 = vadd.f32 %v297, %v372
    %v419 = vadd.f32 %v300, %v372
    %v420 = vadd.f32 %v303, %v373
    %v421 = vadd.f32 %v306, %v373
    %v422 = vmax.f32 %v390, 0.0
    %v423 = vmax.f32 %v391, 0.0
    %v424 = vmax.f32 %v392, 0.0
    %v425 = vmax.f32 %v393, 0.0
    %v426 = vmax.f32 %v394, 0.0
    %v427 = vmax.f32 %v395, 0.0
    %v428 = vmax.f32 %v396, 0.0
    %v429 = vmax.f32 %v397, 0.0
    %v430 = vmax.f32 %v398, 0.0
    %v431 = vmax.f32 %v399, 0.0
    %v432 = vmax.f32 %v400, 0.0
    %v433 = vmax.f32 %v401, 0.0
    %v434 = vmax.f32 %v402, 0.0
    %v435 = vmax.f32 %v403, 0.0
    %v436 = vmax.f32 %v404, 0.0
    %v437 = vmax.f32 %v405, 0.0
    %v438 = vmax.f32 %v406, 0.0
    %v439 = vmax.f32 %v407, 0.0
    %v440 = vmax.f32 %v408, 0.0
    %v441 = vmax.f32 %v409, 0.0
    %v442 = vmax.f32 %v410, 0.0
    %v443 = vmax.f32 %v411, 0.0
    %v444 = vmax.f32 %v412, 0.0
    %v445 = vmax.f32 %v413, 0.0
    %v446 = vmax.f32 %v414, 0.0
    %v447 = vmax.f32 %v415, 0.0
    %v448 = vmax.f32 %v416, 0.0
    %v449 = vmax.f32 %v417, 0.0
    %v450 = vmax.f32 %v418, 0.0
    %v451 = vmax.f32 %v419, 0.0
    %v452 = vmax.f32 %v420, 0.0
    %v453 = vmax.f32 %v421, 0.0
    %v454 = vld [vmem:[%s6] sm:$0x1]
    %v456 = vperm.slane %v454, 0
    %v458 = vmul.f32 %v422, %v456
    %v459 = vmul.f32 %v423, %v456
    %v460 = vmul.f32 %v424, %v456
    %v461 = vmul.f32 %v425, %v456
    %v462 = vmul.f32 %v426, %v456
    %v463 = vmul.f32 %v427, %v456
    %v464 = vmul.f32 %v428, %v456
    %v465 = vmul.f32 %v429, %v456
    %v466 = vmul.f32 %v430, %v456
    %v467 = vmul.f32 %v431, %v456
    %v468 = vmul.f32 %v432, %v456
    %v469 = vmul.f32 %v433, %v456
    %v470 = vmul.f32 %v434, %v456
    %v471 = vmul.f32 %v435, %v456
    %v472 = vmul.f32 %v436, %v456
    %v473 = vmul.f32 %v437, %v456
    %v474 = vmul.f32 %v438, %v456
    %v475 = vmul.f32 %v439, %v456
    %v476 = vmul.f32 %v440, %v456
    %v477 = vmul.f32 %v441, %v456
    %v478 = vmul.f32 %v442, %v456
    %v479 = vmul.f32 %v443, %v456
    %v480 = vmul.f32 %v444, %v456
    %v481 = vmul.f32 %v445, %v456
    %v482 = vmul.f32 %v446, %v456
    %v483 = vmul.f32 %v447, %v456
    %v484 = vmul.f32 %v448, %v456
    %v485 = vmul.f32 %v449, %v456
    %v486 = vmul.f32 %v450, %v456
    %v487 = vmul.f32 %v451, %v456
    %v488 = vmul.f32 %v452, %v456
    %v489 = vmul.f32 %v453, %v456
    %vm490 = vcmask 195584
    %v491 = vsel %vm490, %v458, 0.0
    %492 = vadd.xlane.f32.xlu0 %v491
    %v493 = vpop.xlane.xlu0 %492
    %v494 = vsel %vm490, %v459, 0.0
    %495 = vadd.xlane.f32.xlu0 %v494
    %v496 = vpop.xlane.xlu0 %495
    %v497 = vsel %vm490, %v460, 0.0
    %498 = vadd.xlane.f32.xlu0 %v497
    %v499 = vpop.xlane.xlu0 %498
    %v500 = vsel %vm490, %v461, 0.0
    %501 = vadd.xlane.f32.xlu0 %v500
    %v502 = vpop.xlane.xlu0 %501
    %v503 = vsel %vm490, %v462, 0.0
    %504 = vadd.xlane.f32.xlu0 %v503
    %v505 = vpop.xlane.xlu0 %504
    %v506 = vsel %vm490, %v463, 0.0
    %507 = vadd.xlane.f32.xlu0 %v506
    %v508 = vpop.xlane.xlu0 %507
    %v509 = vsel %vm490, %v464, 0.0
    %510 = vadd.xlane.f32.xlu0 %v509
    %v511 = vpop.xlane.xlu0 %510
    %v512 = vsel %vm490, %v465, 0.0
    %513 = vadd.xlane.f32.xlu0 %v512
    %v514 = vpop.xlane.xlu0 %513
    %v515 = vsel %vm490, %v466, 0.0
    %516 = vadd.xlane.f32.xlu0 %v515
    %v517 = vpop.xlane.xlu0 %516
    %v518 = vsel %vm490, %v467, 0.0
    %519 = vadd.xlane.f32.xlu0 %v518
    %v520 = vpop.xlane.xlu0 %519
    %v521 = vsel %vm490, %v468, 0.0
    %522 = vadd.xlane.f32.xlu0 %v521
    %v523 = vpop.xlane.xlu0 %522
    %v524 = vsel %vm490, %v469, 0.0
    %525 = vadd.xlane.f32.xlu0 %v524
    %v526 = vpop.xlane.xlu0 %525
    %v527 = vsel %vm490, %v470, 0.0
    %528 = vadd.xlane.f32.xlu0 %v527
    %v529 = vpop.xlane.xlu0 %528
    %v530 = vsel %vm490, %v471, 0.0
    %531 = vadd.xlane.f32.xlu0 %v530
    %v532 = vpop.xlane.xlu0 %531
    %v533 = vsel %vm490, %v472, 0.0
    %534 = vadd.xlane.f32.xlu0 %v533
    %v535 = vpop.xlane.xlu0 %534
    %v536 = vsel %vm490, %v473, 0.0
    %537 = vadd.xlane.f32.xlu0 %v536
    %v538 = vpop.xlane.xlu0 %537
    %v539 = vsel %vm490, %v474, 0.0
    %540 = vadd.xlane.f32.xlu0 %v539
    %v541 = vpop.xlane.xlu0 %540
    %v542 = vsel %vm490, %v475, 0.0
    %543 = vadd.xlane.f32.xlu0 %v542
    %v544 = vpop.xlane.xlu0 %543
    %v545 = vsel %vm490, %v476, 0.0
    %546 = vadd.xlane.f32.xlu0 %v545
    %v547 = vpop.xlane.xlu0 %546
    %v548 = vsel %vm490, %v477, 0.0
    %549 = vadd.xlane.f32.xlu0 %v548
    %v550 = vpop.xlane.xlu0 %549
    %v551 = vsel %vm490, %v478, 0.0
    %552 = vadd.xlane.f32.xlu0 %v551
    %v553 = vpop.xlane.xlu0 %552
    %v554 = vsel %vm490, %v479, 0.0
    %555 = vadd.xlane.f32.xlu0 %v554
    %v556 = vpop.xlane.xlu0 %555
    %v557 = vsel %vm490, %v480, 0.0
    %558 = vadd.xlane.f32.xlu0 %v557
    %v559 = vpop.xlane.xlu0 %558
    %v560 = vsel %vm490, %v481, 0.0
    %561 = vadd.xlane.f32.xlu0 %v560
    %v562 = vpop.xlane.xlu0 %561
    %v563 = vsel %vm490, %v482, 0.0
    %564 = vadd.xlane.f32.xlu0 %v563
    %v565 = vpop.xlane.xlu0 %564
    %v566 = vsel %vm490, %v483, 0.0
    %567 = vadd.xlane.f32.xlu0 %v566
    %v568 = vpop.xlane.xlu0 %567
    %v569 = vsel %vm490, %v484, 0.0
    %570 = vadd.xlane.f32.xlu0 %v569
    %v571 = vpop.xlane.xlu0 %570
    %v572 = vsel %vm490, %v485, 0.0
    %573 = vadd.xlane.f32.xlu0 %v572
    %v574 = vpop.xlane.xlu0 %573
    %v575 = vsel %vm490, %v486, 0.0
    %576 = vadd.xlane.f32.xlu0 %v575
    %v577 = vpop.xlane.xlu0 %576
    %v578 = vsel %vm490, %v487, 0.0
    %579 = vadd.xlane.f32.xlu0 %v578
    %v580 = vpop.xlane.xlu0 %579
    %v581 = vsel %vm490, %v488, 0.0
    %582 = vadd.xlane.f32.xlu0 %v581
    %v583 = vpop.xlane.xlu0 %582
    %v584 = vsel %vm490, %v489, 0.0
    %585 = vadd.xlane.f32.xlu0 %v584
    %v586 = vpop.xlane.xlu0 %585
    %s587 = sld [smem:[#allocation2]]
    %v588 = vstv %s587
    %v589 = vadd.f32 %v493, %v588
    %v590 = vadd.f32 %v496, %v588
    %v591 = vadd.f32 %v499, %v588
    %v592 = vadd.f32 %v502, %v588
    %v593 = vadd.f32 %v505, %v588
    %v594 = vadd.f32 %v508, %v588
    %v595 = vadd.f32 %v511, %v588
    %v596 = vadd.f32 %v514, %v588
    %v597 = vadd.f32 %v517, %v588
    %v598 = vadd.f32 %v520, %v588
    %v599 = vadd.f32 %v523, %v588
    %v600 = vadd.f32 %v526, %v588
    %v601 = vadd.f32 %v529, %v588
    %v602 = vadd.f32 %v532, %v588
    %v603 = vadd.f32 %v535, %v588
    %v604 = vadd.f32 %v538, %v588
    %v605 = vadd.f32 %v541, %v588
    %v606 = vadd.f32 %v544, %v588
    %v607 = vadd.f32 %v547, %v588
    %v608 = vadd.f32 %v550, %v588
    %v609 = vadd.f32 %v553, %v588
    %v610 = vadd.f32 %v556, %v588
    %v611 = vadd.f32 %v559, %v588
    %v612 = vadd.f32 %v562, %v588
    %v613 = vadd.f32 %v565, %v588
    %v614 = vadd.f32 %v568, %v588
    %v615 = vadd.f32 %v571, %v588
    %v616 = vadd.f32 %v574, %v588
    %v617 = vadd.f32 %v577, %v588
    %v618 = vadd.f32 %v580, %v588
    %v619 = vadd.f32 %v583, %v588
    %v620 = vadd.f32 %v586, %v588
    %v621 = vlaneseq
    %v622 = vand.u32 %v621, 127
    %vm623 = vcmp.lt.s32.totalorder %v622, 14
    %v656 = vperm.slane %v589, %v622
    %v657 = vadd.s32 %v622, 4294967288
    %v658 = vperm.slane %v590, %v657
    %vm659 = vcmask 130112
    %v660 = vsel %vm659, %v658, %v656
    %v661 = vperm.slane %v591, %v622
    %v662 = vperm.slane %v592, %v657
    %v663 = vsel %vm659, %v662, %v661
    %v664 = vperm.slane %v593, %v622
    %v665 = vperm.slane %v594, %v657
    %v666 = vsel %vm659, %v665, %v664
    %v667 = vperm.slane %v595, %v622
    %v668 = vperm.slane %v596, %v657
    %v669 = vsel %vm659, %v668, %v667
    %v670 = vperm.slane %v597, %v622
    %v671 = vperm.slane %v598, %v657
    %v672 = vsel %vm659, %v671, %v670
    %v673 = vperm.slane %v599, %v622
    %v674 = vperm.slane %v600, %v657
    %v675 = vsel %vm659, %v674, %v673
    %v676 = vperm.slane %v601, %v622
    %v677 = vperm.slane %v602, %v657
    %v678 = vsel %vm659, %v677, %v676
    %v679 = vperm.slane %v603, %v622
    %v680 = vperm.slane %v604, %v657
    %v681 = vsel %vm659, %v680, %v679
    %v682 = vperm.slane %v605, %v622
    %v683 = vperm.slane %v606, %v657
    %v684 = vsel %vm659, %v683, %v682
    %v685 = vperm.slane %v607, %v622
    %v686 = vperm.slane %v608, %v657
    %v687 = vsel %vm659, %v686, %v685
    %v688 = vperm.slane %v609, %v622
    %v689 = vperm.slane %v610, %v657
    %v690 = vsel %vm659, %v689, %v688
    %v691 = vperm.slane %v611, %v622
    %v692 = vperm.slane %v612, %v657
    %v693 = vsel %vm659, %v692, %v691
    %v694 = vperm.slane %v613, %v622
    %v695 = vperm.slane %v614, %v657
    %v696 = vsel %vm659, %v695, %v694
    %v697 = vperm.slane %v615, %v622
    %v698 = vperm.slane %v616, %v657
    %v699 = vsel %vm659, %v698, %v697
    %v700 = vperm.slane %v617, %v622
    %v701 = vperm.slane %v618, %v657
    %v702 = vsel %vm659, %v701, %v700
    %v703 = vperm.slane %v619, %v622
    %v704 = vperm.slane %v620, %v657
    %v705 = vsel %vm659, %v704, %v703
    %vm706 = vcmask 1041409
    %v707 = vsel %vm706, %v663, %v660
    %vm708 = vcmask 1042434
    %v709 = vsel %vm708, %v666, %v707
    %vm710 = vcmask 1043459
    %v711 = vsel %vm710, %v669, %v709
    %vm712 = vcmask 1044484
    %v713 = vsel %vm712, %v672, %v711
    %vm714 = vcmask 1045509
    %v715 = vsel %vm714, %v675, %v713
    %vm716 = vcmask 1046534
    %v717 = vsel %vm716, %v678, %v715
    %vm718 = vcmask 1047559
    %v719 = vsel %vm718, %v681, %v717
    %v720 = vsel %vm706, %v687, %v684
    %v721 = vsel %vm708, %v690, %v720
    %v722 = vsel %vm710, %v693, %v721
    %v723 = vsel %vm712, %v696, %v722
    %v724 = vsel %vm714, %v699, %v723
    %v725 = vsel %vm716, %v702, %v724
    %v726 = vsel %vm718, %v705, %v725
    %v729 = vsel %vm623, %v719, -1e+30
    %v730 = vsel %vm623, %v726, -1e+30
    %vm731 = vcmask 130048
    %v732 = vsel %vm731, %v729, -inf
    %733 = vmax.xlane.f32.xlu0 %v732
    %v734 = vpop.xlane.xlu0 %733
    %v735 = vsel %vm731, %v730, -inf
    %736 = vmax.xlane.f32.xlu0 %v735
    %v737 = vpop.xlane.xlu0 %736
    %v738 = vsub.f32 %v729, %v734
    %v739 = vsub.f32 %v730, %v737
    %v740 = vmul.f32 %v738, 1.442695
    %v741 = vpow.pop %v740
    %v742 = vmul.f32 %v739, 1.442695
    %v743 = vpow.pop %v742
    %v744 = vsel %vm731, %v741, 0.0
    %745 = vadd.xlane.f32.xlu0 %v744
    %v746 = vpop.xlane.xlu0 %745
    %v747 = vsel %vm731, %v743, 0.0
    %748 = vadd.xlane.f32.xlu0 %v747
    %v749 = vpop.xlane.xlu0 %748
    %v750 = vrcp.pop %v746
    %v751 = vmul.f32 %v746, %v750
    %v752 = vsub.f32 1.0, %v751
    %v753 = vmul.f32 %v750, %v752
    %v754 = vadd.f32 %v750, %v753
    %vm755 = vweird.f32 %v746
    %vm756 = vweird.f32 %v750
    %vm757 = vmor %vm755, %vm756
    %v758 = vsel %vm757, %v750, %v754
    %v759 = vand.u32 2147483647, %v746
    %vm760 = vcmp.eq.f32.partialorder %v759, 8.507059e+37
    %v761 = vand.u32 %v746, 2147483648
    %v762 = vor.u32 1.1754944e-38, %v761
    %v763 = vsel %vm760, %v762, %v758
    %v764 = vmul.f32 %v741, %v763
    %v765 = vrcp.pop %v749
    %v766 = vmul.f32 %v749, %v765
    %v767 = vsub.f32 1.0, %v766
    %v768 = vmul.f32 %v765, %v767
    %v769 = vadd.f32 %v765, %v768
    %vm770 = vweird.f32 %v749
    %vm771 = vweird.f32 %v765
    %vm772 = vmor %vm770, %vm771
    %v773 = vsel %vm772, %v765, %v769
    %v774 = vand.u32 2147483647, %v749
    %vm775 = vcmp.eq.f32.partialorder %v774, 8.507059e+37
    %v776 = vand.u32 %v749, 2147483648
    %v777 = vor.u32 1.1754944e-38, %v776
    %v778 = vsel %vm775, %v777, %v773
    %v779 = vmul.f32 %v743, %v778
    %v780 = vperm.slane %v764, 0
    %v781 = vlaneseq
    %v782 = vshrl.u32 %v781, 7
    %784 = vset.pattern.permute.xlu0 %v782
    %785 = vperm.xlu0 %784, %v780
    %v786 = vpop.permute.xlu0 %785
    %v787 = vlaneseq
    %v788 = vshrl.u32 %v787, 7
    %v789 = vadd.s32 %v788, 8
    %790 = vset.pattern.permute.xlu0 %v789
    %791 = vperm.xlu0 %790, %v780
    %v792 = vpop.permute.xlu0 %791
    %v793 = vperm.slane %v764, 1
    %v794 = vlaneseq
    %v795 = vshrl.u32 %v794, 7
    %797 = vset.pattern.permute.xlu0 %v795
    %798 = vperm.xlu0 %797, %v793
    %v799 = vpop.permute.xlu0 %798
    %v800 = vlaneseq
    %v801 = vshrl.u32 %v800, 7
    %v802 = vadd.s32 %v801, 8
    %803 = vset.pattern.permute.xlu0 %v802
    %804 = vperm.xlu0 %803, %v793
    %v805 = vpop.permute.xlu0 %804
    %v806 = vperm.slane %v764, 2
    %v807 = vlaneseq
    %v808 = vshrl.u32 %v807, 7
    %810 = vset.pattern.permute.xlu0 %v808
    %811 = vperm.xlu0 %810, %v806
    %v812 = vpop.permute.xlu0 %811
    %v813 = vlaneseq
    %v814 = vshrl.u32 %v813, 7
    %v815 = vadd.s32 %v814, 8
    %816 = vset.pattern.permute.xlu0 %v815
    %817 = vperm.xlu0 %816, %v806
    %v818 = vpop.permute.xlu0 %817
    %v819 = vperm.slane %v764, 3
    %v820 = vlaneseq
    %v821 = vshrl.u32 %v820, 7
    %823 = vset.pattern.permute.xlu0 %v821
    %824 = vperm.xlu0 %823, %v819
    %v825 = vpop.permute.xlu0 %824
    %v826 = vlaneseq
    %v827 = vshrl.u32 %v826, 7
    %v828 = vadd.s32 %v827, 8
    %829 = vset.pattern.permute.xlu0 %v828
    %830 = vperm.xlu0 %829, %v819
    %v831 = vpop.permute.xlu0 %830
    %v832 = vperm.slane %v764, 4
    %v833 = vlaneseq
    %v834 = vshrl.u32 %v833, 7
    %836 = vset.pattern.permute.xlu0 %v834
    %837 = vperm.xlu0 %836, %v832
    %v838 = vpop.permute.xlu0 %837
    %v839 = vlaneseq
    %v840 = vshrl.u32 %v839, 7
    %v841 = vadd.s32 %v840, 8
    %842 = vset.pattern.permute.xlu0 %v841
    %843 = vperm.xlu0 %842, %v832
    %v844 = vpop.permute.xlu0 %843
    %v845 = vperm.slane %v764, 5
    %v846 = vlaneseq
    %v847 = vshrl.u32 %v846, 7
    %849 = vset.pattern.permute.xlu0 %v847
    %850 = vperm.xlu0 %849, %v845
    %v851 = vpop.permute.xlu0 %850
    %v852 = vlaneseq
    %v853 = vshrl.u32 %v852, 7
    %v854 = vadd.s32 %v853, 8
    %855 = vset.pattern.permute.xlu0 %v854
    %856 = vperm.xlu0 %855, %v845
    %v857 = vpop.permute.xlu0 %856
    %v858 = vperm.slane %v764, 6
    %v859 = vlaneseq
    %v860 = vshrl.u32 %v859, 7
    %862 = vset.pattern.permute.xlu0 %v860
    %863 = vperm.xlu0 %862, %v858
    %v864 = vpop.permute.xlu0 %863
    %v865 = vlaneseq
    %v866 = vshrl.u32 %v865, 7
    %v867 = vadd.s32 %v866, 8
    %868 = vset.pattern.permute.xlu0 %v867
    %869 = vperm.xlu0 %868, %v858
    %v870 = vpop.permute.xlu0 %869
    %v871 = vperm.slane %v764, 7
    %v872 = vlaneseq
    %v873 = vshrl.u32 %v872, 7
    %875 = vset.pattern.permute.xlu0 %v873
    %876 = vperm.xlu0 %875, %v871
    %v877 = vpop.permute.xlu0 %876
    %v878 = vlaneseq
    %v879 = vshrl.u32 %v878, 7
    %v880 = vadd.s32 %v879, 8
    %881 = vset.pattern.permute.xlu0 %v880
    %882 = vperm.xlu0 %881, %v871
    %v883 = vpop.permute.xlu0 %882
    %v884 = vperm.slane %v779, 0
    %v885 = vlaneseq
    %v886 = vshrl.u32 %v885, 7
    %888 = vset.pattern.permute.xlu0 %v886
    %889 = vperm.xlu0 %888, %v884
    %v890 = vpop.permute.xlu0 %889
    %v891 = vlaneseq
    %v892 = vshrl.u32 %v891, 7
    %v893 = vadd.s32 %v892, 8
    %894 = vset.pattern.permute.xlu0 %v893
    %895 = vperm.xlu0 %894, %v884
    %v896 = vpop.permute.xlu0 %895
    %v897 = vperm.slane %v779, 1
    %v898 = vlaneseq
    %v899 = vshrl.u32 %v898, 7
    %901 = vset.pattern.permute.xlu0 %v899
    %902 = vperm.xlu0 %901, %v897
    %v903 = vpop.permute.xlu0 %902
    %v904 = vlaneseq
    %v905 = vshrl.u32 %v904, 7
    %v906 = vadd.s32 %v905, 8
    %907 = vset.pattern.permute.xlu0 %v906
    %908 = vperm.xlu0 %907, %v897
    %v909 = vpop.permute.xlu0 %908
    %v910 = vperm.slane %v779, 2
    %v911 = vlaneseq
    %v912 = vshrl.u32 %v911, 7
    %914 = vset.pattern.permute.xlu0 %v912
    %915 = vperm.xlu0 %914, %v910
    %v916 = vpop.permute.xlu0 %915
    %v917 = vlaneseq
    %v918 = vshrl.u32 %v917, 7
    %v919 = vadd.s32 %v918, 8
    %920 = vset.pattern.permute.xlu0 %v919
    %921 = vperm.xlu0 %920, %v910
    %v922 = vpop.permute.xlu0 %921
    %v923 = vperm.slane %v779, 3
    %v924 = vlaneseq
    %v925 = vshrl.u32 %v924, 7
    %927 = vset.pattern.permute.xlu0 %v925
    %928 = vperm.xlu0 %927, %v923
    %v929 = vpop.permute.xlu0 %928
    %v930 = vlaneseq
    %v931 = vshrl.u32 %v930, 7
    %v932 = vadd.s32 %v931, 8
    %933 = vset.pattern.permute.xlu0 %v932
    %934 = vperm.xlu0 %933, %v923
    %v935 = vpop.permute.xlu0 %934
    %v936 = vperm.slane %v779, 4
    %v937 = vlaneseq
    %v938 = vshrl.u32 %v937, 7
    %940 = vset.pattern.permute.xlu0 %v938
    %941 = vperm.xlu0 %940, %v936
    %v942 = vpop.permute.xlu0 %941
    %v943 = vlaneseq
    %v944 = vshrl.u32 %v943, 7
    %v945 = vadd.s32 %v944, 8
    %946 = vset.pattern.permute.xlu0 %v945
    %947 = vperm.xlu0 %946, %v936
    %v948 = vpop.permute.xlu0 %947
    %v949 = vperm.slane %v779, 5
    %v950 = vlaneseq
    %v951 = vshrl.u32 %v950, 7
    %953 = vset.pattern.permute.xlu0 %v951
    %954 = vperm.xlu0 %953, %v949
    %v955 = vpop.permute.xlu0 %954
    %v956 = vlaneseq
    %v957 = vshrl.u32 %v956, 7
    %v958 = vadd.s32 %v957, 8
    %959 = vset.pattern.permute.xlu0 %v958
    %960 = vperm.xlu0 %959, %v949
    %v961 = vpop.permute.xlu0 %960
    %v962 = vperm.slane %v779, 6
    %v963 = vlaneseq
    %v964 = vshrl.u32 %v963, 7
    %966 = vset.pattern.permute.xlu0 %v964
    %967 = vperm.xlu0 %966, %v962
    %v968 = vpop.permute.xlu0 %967
    %v969 = vlaneseq
    %v970 = vshrl.u32 %v969, 7
    %v971 = vadd.s32 %v970, 8
    %972 = vset.pattern.permute.xlu0 %v971
    %973 = vperm.xlu0 %972, %v962
    %v974 = vpop.permute.xlu0 %973
    %v975 = vperm.slane %v779, 7
    %v976 = vlaneseq
    %v977 = vshrl.u32 %v976, 7
    %979 = vset.pattern.permute.xlu0 %v977
    %980 = vperm.xlu0 %979, %v975
    %v981 = vpop.permute.xlu0 %980
    %v982 = vlaneseq
    %v983 = vshrl.u32 %v982, 7
    %v984 = vadd.s32 %v983, 8
    %985 = vset.pattern.permute.xlu0 %v984
    %986 = vperm.xlu0 %985, %v975
    %v987 = vpop.permute.xlu0 %986
    %v988 = vmul.f32 %v786, %v50
    %v989 = vmul.f32 %v792, %v51
    %v990 = vmul.f32 %v799, %v52
    %v991 = vmul.f32 %v805, %v53
    %v992 = vmul.f32 %v812, %v54
    %v993 = vmul.f32 %v818, %v55
    %v994 = vmul.f32 %v825, %v56
    %v995 = vmul.f32 %v831, %v57
    %v996 = vmul.f32 %v838, %v58
    %v997 = vmul.f32 %v844, %v59
    %v998 = vmul.f32 %v851, %v60
    %v999 = vmul.f32 %v857, %v61
    %v1000 = vmul.f32 %v864, %v62
    %v1001 = vmul.f32 %v870, %v63
    %v1002 = vmul.f32 %v877, %v64
    %v1003 = vmul.f32 %v883, %v65
    %v1004 = vmul.f32 %v890, %v66
    %v1005 = vmul.f32 %v896, %v67
    %v1006 = vmul.f32 %v903, %v68
    %v1007 = vmul.f32 %v909, %v69
    %v1008 = vmul.f32 %v916, %v70
    %v1009 = vmul.f32 %v922, %v71
    %v1010 = vmul.f32 %v929, %v72
    %v1011 = vmul.f32 %v935, %v73
    %v1012 = vmul.f32 %v942, %v74
    %v1013 = vmul.f32 %v948, %v75
    %v1014 = vmul.f32 %v955, %v76
    %v1015 = vmul.f32 %v961, %v77
    %v1016 = vmul.f32 %v968, %v78
    %v1017 = vmul.f32 %v974, %v79
    %v1018 = vmul.f32 %v981, %v80
    %v1019 = vmul.f32 %v987, %v81
    %v1020 = vsel %vm98, %v988, 0.0
    %v1021 = vsel %vm98, %v989, 0.0
    %v1022 = vadd.f32 %v1020, %v1021
    %v1023 = vrot.slane %v1022, 4
    %v1024 = vadd.f32 %v1022, %v1023
    %v1025 = vrot.slane %v1024, 2
    %v1026 = vadd.f32 %v1024, %v1025
    %v1027 = vrot.slane %v1026, 1
    %v1028 = vadd.f32 %v1026, %v1027
    %v1029 = vsel %vm98, %v990, 0.0
    %v1030 = vsel %vm98, %v991, 0.0
    %v1031 = vadd.f32 %v1029, %v1030
    %v1032 = vrot.slane %v1031, 4
    %v1033 = vadd.f32 %v1031, %v1032
    %v1034 = vrot.slane %v1033, 2
    %v1035 = vadd.f32 %v1033, %v1034
    %v1036 = vrot.slane %v1035, 1
    %v1037 = vadd.f32 %v1035, %v1036
    %v1038 = vsel %vm98, %v992, 0.0
    %v1039 = vsel %vm98, %v993, 0.0
    %v1040 = vadd.f32 %v1038, %v1039
    %v1041 = vrot.slane %v1040, 4
    %v1042 = vadd.f32 %v1040, %v1041
    %v1043 = vrot.slane %v1042, 2
    %v1044 = vadd.f32 %v1042, %v1043
    %v1045 = vrot.slane %v1044, 1
    %v1046 = vadd.f32 %v1044, %v1045
    %v1047 = vsel %vm98, %v994, 0.0
    %v1048 = vsel %vm98, %v995, 0.0
    %v1049 = vadd.f32 %v1047, %v1048
    %v1050 = vrot.slane %v1049, 4
    %v1051 = vadd.f32 %v1049, %v1050
    %v1052 = vrot.slane %v1051, 2
    %v1053 = vadd.f32 %v1051, %v1052
    %v1054 = vrot.slane %v1053, 1
    %v1055 = vadd.f32 %v1053, %v1054
    %v1056 = vsel %vm98, %v996, 0.0
    %v1057 = vsel %vm98, %v997, 0.0
    %v1058 = vadd.f32 %v1056, %v1057
    %v1059 = vrot.slane %v1058, 4
    %v1060 = vadd.f32 %v1058, %v1059
    %v1061 = vrot.slane %v1060, 2
    %v1062 = vadd.f32 %v1060, %v1061
    %v1063 = vrot.slane %v1062, 1
    %v1064 = vadd.f32 %v1062, %v1063
    %v1065 = vsel %vm98, %v998, 0.0
    %v1066 = vsel %vm98, %v999, 0.0
    %v1067 = vadd.f32 %v1065, %v1066
    %v1068 = vrot.slane %v1067, 4
    %v1069 = vadd.f32 %v1067, %v1068
    %v1070 = vrot.slane %v1069, 2
    %v1071 = vadd.f32 %v1069, %v1070
    %v1072 = vrot.slane %v1071, 1
    %v1073 = vadd.f32 %v1071, %v1072
    %v1074 = vsel %vm98, %v1000, 0.0
    %v1075 = vsel %vm98, %v1001, 0.0
    %v1076 = vadd.f32 %v1074, %v1075
    %v1077 = vrot.slane %v1076, 4
    %v1078 = vadd.f32 %v1076, %v1077
    %v1079 = vrot.slane %v1078, 2
    %v1080 = vadd.f32 %v1078, %v1079
    %v1081 = vrot.slane %v1080, 1
    %v1082 = vadd.f32 %v1080, %v1081
    %v1083 = vsel %vm98, %v1002, 0.0
    %v1084 = vsel %vm98, %v1003, 0.0
    %v1085 = vadd.f32 %v1083, %v1084
    %v1086 = vrot.slane %v1085, 4
    %v1087 = vadd.f32 %v1085, %v1086
    %v1088 = vrot.slane %v1087, 2
    %v1089 = vadd.f32 %v1087, %v1088
    %v1090 = vrot.slane %v1089, 1
    %v1091 = vadd.f32 %v1089, %v1090
    %v1092 = vsel %vm98, %v1004, 0.0
    %v1093 = vsel %vm98, %v1005, 0.0
    %v1094 = vadd.f32 %v1092, %v1093
    %v1095 = vrot.slane %v1094, 4
    %v1096 = vadd.f32 %v1094, %v1095
    %v1097 = vrot.slane %v1096, 2
    %v1098 = vadd.f32 %v1096, %v1097
    %v1099 = vrot.slane %v1098, 1
    %v1100 = vadd.f32 %v1098, %v1099
    %v1101 = vsel %vm98, %v1006, 0.0
    %v1102 = vsel %vm98, %v1007, 0.0
    %v1103 = vadd.f32 %v1101, %v1102
    %v1104 = vrot.slane %v1103, 4
    %v1105 = vadd.f32 %v1103, %v1104
    %v1106 = vrot.slane %v1105, 2
    %v1107 = vadd.f32 %v1105, %v1106
    %v1108 = vrot.slane %v1107, 1
    %v1109 = vadd.f32 %v1107, %v1108
    %v1110 = vsel %vm98, %v1008, 0.0
    %v1111 = vsel %vm98, %v1009, 0.0
    %v1112 = vadd.f32 %v1110, %v1111
    %v1113 = vrot.slane %v1112, 4
    %v1114 = vadd.f32 %v1112, %v1113
    %v1115 = vrot.slane %v1114, 2
    %v1116 = vadd.f32 %v1114, %v1115
    %v1117 = vrot.slane %v1116, 1
    %v1118 = vadd.f32 %v1116, %v1117
    %v1119 = vsel %vm98, %v1010, 0.0
    %v1120 = vsel %vm98, %v1011, 0.0
    %v1121 = vadd.f32 %v1119, %v1120
    %v1122 = vrot.slane %v1121, 4
    %v1123 = vadd.f32 %v1121, %v1122
    %v1124 = vrot.slane %v1123, 2
    %v1125 = vadd.f32 %v1123, %v1124
    %v1126 = vrot.slane %v1125, 1
    %v1127 = vadd.f32 %v1125, %v1126
    %v1128 = vsel %vm98, %v1012, 0.0
    %v1129 = vsel %vm98, %v1013, 0.0
    %v1130 = vadd.f32 %v1128, %v1129
    %v1131 = vrot.slane %v1130, 4
    %v1132 = vadd.f32 %v1130, %v1131
    %v1133 = vrot.slane %v1132, 2
    %v1134 = vadd.f32 %v1132, %v1133
    %v1135 = vrot.slane %v1134, 1
    %v1136 = vadd.f32 %v1134, %v1135
    %v1137 = vsel %vm98, %v1014, 0.0
    %v1138 = vsel %vm98, %v1015, 0.0
    %v1139 = vadd.f32 %v1137, %v1138
    %v1140 = vrot.slane %v1139, 4
    %v1141 = vadd.f32 %v1139, %v1140
    %v1142 = vrot.slane %v1141, 2
    %v1143 = vadd.f32 %v1141, %v1142
    %v1144 = vrot.slane %v1143, 1
    %v1145 = vadd.f32 %v1143, %v1144
    %v1146 = vsel %vm98, %v1016, 0.0
    %v1147 = vsel %vm98, %v1017, 0.0
    %v1148 = vadd.f32 %v1146, %v1147
    %v1149 = vrot.slane %v1148, 4
    %v1150 = vadd.f32 %v1148, %v1149
    %v1151 = vrot.slane %v1150, 2
    %v1152 = vadd.f32 %v1150, %v1151
    %v1153 = vrot.slane %v1152, 1
    %v1154 = vadd.f32 %v1152, %v1153
    %v1155 = vsel %vm98, %v1018, 0.0
    %v1156 = vsel %vm98, %v1019, 0.0
    %v1157 = vadd.f32 %v1155, %v1156
    %v1158 = vrot.slane %v1157, 4
    %v1159 = vadd.f32 %v1157, %v1158
    %v1160 = vrot.slane %v1159, 2
    %v1161 = vadd.f32 %v1159, %v1160
    %v1162 = vrot.slane %v1161, 1
    %v1163 = vadd.f32 %v1161, %v1162
    %v1180 = vsel %vm706, %v1037, %v1028
    %v1181 = vsel %vm708, %v1046, %v1180
    %v1182 = vsel %vm710, %v1055, %v1181
    %v1183 = vsel %vm712, %v1064, %v1182
    %v1184 = vsel %vm714, %v1073, %v1183
    %v1185 = vsel %vm716, %v1082, %v1184
    %v1186 = vsel %vm718, %v1091, %v1185
    %v1187 = vsel %vm706, %v1109, %v1100
    %v1188 = vsel %vm708, %v1118, %v1187
    %v1189 = vsel %vm710, %v1127, %v1188
    %v1190 = vsel %vm712, %v1136, %v1189
    %v1191 = vsel %vm714, %v1145, %v1190
    %v1192 = vsel %vm716, %v1154, %v1191
    %v1193 = vsel %vm718, %v1163, %v1192
    %1196 = vst.msk [vmem:[#allocation6] sm:$0xff] %vm98, %v1186
    %1197 = vst.msk [vmem:[#allocation6 + $0x8] sm:$0xff] %vm98, %v1193
    %1198 = vst.msk [vmem:[#allocation7] sm:$0xff] %vm731, %v764
    %1199 = vst.msk [vmem:[#allocation7 + $0x8] sm:$0xff] %vm731, %v779
    // Predicated region
    $region38: #{tpu_custom_call.1} parent=1 // pred_check
      _
    $region39: #{tpu_custom_call.1} parent=1 // pred_check_branch
      %1201 = sbr.rel (0) target = $region41
    $region40: #{tpu_custom_call.1} parent=1 // pred_region
      %1203 = vsyncadd [#allocation5], 0
      %s1204 = sshll.u32 [#allocation6], 4
      %s1205 = int_to_ptr.vmem [resolvable:$true] %s1204
      %s1206 = sshll.u32 %s8, 4
      %s1207 = int_to_ptr.hbm [resolvable:$true] %s1206
      %1212 = dma.vmem_to_hbm [thread:$0]  %s1205, 256, %s1207, [#allocation5], 128, 128, 8
    $region41: #{tpu_custom_call.1} parent=1 // pred_fallthru
      _
    // Predicated region
    $region42: #{tpu_custom_call.1} parent=1 // pred_check
      _
    $region43: #{tpu_custom_call.1} parent=1 // pred_check_branch
      %1214 = sbr.rel (0) target = $region45
    $region44: #{tpu_custom_call.1} parent=1 // pred_region
      %1216 = vsyncadd [#allocation8], 0
      %s1217 = sshll.u32 [#allocation7], 4
      %s1218 = int_to_ptr.vmem [resolvable:$true] %s1217
      %s1219 = sshll.u32 %s9, 4
      %s1220 = int_to_ptr.hbm [resolvable:$true] %s1219
      %1225 = dma.vmem_to_hbm [thread:$0]  %s1218, 256, %s1220, [#allocation8], 128, 128, 8
    $region45: #{tpu_custom_call.1} parent=1 // pred_fallthru
      _
    // Predicated region
    $region46: #{tpu_custom_call.1} parent=1 // pred_check
      _
    $region47: #{tpu_custom_call.1} parent=1 // pred_check_branch
      %1227 = sbr.rel (0) target = $region49
    $region48: #{tpu_custom_call.1} parent=1 // pred_region
      %1229 = dma.done [#allocation5], 256
    $region49: #{tpu_custom_call.1} parent=1 // pred_fallthru
      _
    // Predicated region
    $region50: #{tpu_custom_call.1} parent=1 // pred_check
      _
    $region51: #{tpu_custom_call.1} parent=1 // pred_check_branch
      %1231 = sbr.rel (0) target = $region53
    $region52: #{tpu_custom_call.1} parent=1 // pred_region
      %1233 = dma.done [#allocation8], 256
    $region53: #{tpu_custom_call.1} parent=1 // pred_fallthru
      _
    %1234 = vsyncpa [#allocation4], 1
    %1235 = vsyncpa [#allocation5], 1
    %1236 = vsyncpa [#allocation8], 1

</llo_original>
